<compile_context>
chip_gen: v5e
topology: v5e:2x2
jax: 0.10.0
libtpu: 0.0.40
codegen_flags: <defaults>
</compile_context>

<pallas_src>
import jax
import jax.numpy as jnp
from jax.experimental import pallas as pl
from jax.experimental.pallas import tpu as pltpu


SUBLANE = 8
LANE = 128

IN_DIM = 784            # input features (full-dim block -> no (8,128) issue)
OUT_DIM = 10            # original number of logits
OUT_PAD = 128           # lane-dense output slab (sliced back to 10 outside)
HIDDEN = (128, 64, 32)

DEFAULT_TILE_B = 512    # per-tile VMEM: x 512*784*4 ~= 1.6 MB (x2 buffers),
                        # out 512*128*4 = 256 KB (x2), weights ~0.23 MB
                        # resident -> well under v5e 16 MiB scoped VMEM.


def _round_up(n, m):
    return (n + m - 1) // m * m


def _mlp_kernel(x_ref,
                w1_ref, b1_ref,
                w2_ref, b2_ref,
                w3_ref, b3_ref,
                w4_ref, b4_ref,
                o_ref):
    # Cast the streamed f32 tile to bf16 once; all matmuls use bf16 MXU
    # operands with f32 accumulation.
    x = x_ref[...].astype(jnp.bfloat16)
    # fc1 + relu
    h = jnp.dot(x, w1_ref[...], preferred_element_type=jnp.float32)
    h = jnp.maximum(h + b1_ref[...], 0.0)
    # fc2 + relu
    h = jnp.dot(h.astype(jnp.bfloat16), w2_ref[...],
                preferred_element_type=jnp.float32)
    h = jnp.maximum(h + b2_ref[...], 0.0)
    # fc3 + relu
    h = jnp.dot(h.astype(jnp.bfloat16), w3_ref[...],
                preferred_element_type=jnp.float32)
    h = jnp.maximum(h + b3_ref[...], 0.0)
    # fc4 (no activation); output slab is lane-dense (padded to 128 columns).
    h = jnp.dot(h.astype(jnp.bfloat16), w4_ref[...],
                preferred_element_type=jnp.float32)
    o_ref[...] = (h + b4_ref[...]).astype(o_ref.dtype)


def prepare_params(params):
    """Cast f32 (in, out)/(1, out) params into kernel layout.

    Weights -> bf16 (fc4 output cols zero-padded 10 -> 128 for a lane-dense
    output store); biases stay f32 (fc4 bias padded 10 -> 128).  Zero padding
    keeps the math identical on the un-padded slice.
    """
    w1 = params["w1"].astype(jnp.bfloat16)
    w2 = params["w2"].astype(jnp.bfloat16)
    w3 = params["w3"].astype(jnp.bfloat16)
    w4 = jnp.zeros((HIDDEN[2], OUT_PAD), jnp.bfloat16)
    w4 = w4.at[:, :OUT_DIM].set(params["w4"].astype(jnp.bfloat16))

    b1 = params["b1"].astype(jnp.float32)
    b2 = params["b2"].astype(jnp.float32)
    b3 = params["b3"].astype(jnp.float32)
    b4 = jnp.zeros((1, OUT_PAD), jnp.float32)
    b4 = b4.at[:, :OUT_DIM].set(params["b4"].astype(jnp.float32))
    return (w1, b1, w2, b2, w3, b3, w4, b4)


def perceptron_forward(x, params, tile_b=DEFAULT_TILE_B):
    """x: (B, 784) f32; params: dict w1..w4 (in,out) f32, b1..b4 (1,out) f32."""
    B = x.shape[0]
    # Batch tile: at most `tile_b`, at least a sublane-aligned cover of B.
    tb = min(tile_b, _round_up(B, SUBLANE))
    B_pad = _round_up(B, tb)

    # Only batch padding (rows) is needed; x keeps its f32 dtype and 784
    # columns (block uses the full last dim, so the (8,128) rule is satisfied).
    if B_pad != B:
        x_in = jnp.zeros((B_pad, IN_DIM), x.dtype).at[:B, :].set(x)
    else:
        x_in = x

    kparams = prepare_params(params)

    grid = (B_pad // tb,)
    x_spec = pl.BlockSpec((tb, IN_DIM), lambda i: (i, 0))
    # Weights/biases: constant index_map -> fetched once, VMEM-resident.
    def const_spec(arr):
        return pl.BlockSpec(arr.shape, lambda i: (0, 0))
    in_specs = [x_spec] + [const_spec(p) for p in kparams]
    out_spec = pl.BlockSpec((tb, OUT_PAD), lambda i: (i, 0))

    flops = 2 * B_pad * (IN_DIM * HIDDEN[0] + HIDDEN[0] * HIDDEN[1]
                         + HIDDEN[1] * HIDDEN[2] + HIDDEN[2] * OUT_PAD)
    bytes_accessed = (B_pad * IN_DIM * 4            # f32 x stream
                      + B_pad * OUT_PAD * 4         # f32 output slab
                      + sum(int(p.size) * p.dtype.itemsize for p in kparams))

    out_p = pl.pallas_call(
        _mlp_kernel,
        out_shape=jax.ShapeDtypeStruct((B_pad, OUT_PAD), jnp.float32),
        grid=grid,
        in_specs=in_specs,
        out_specs=out_spec,
        compiler_params=pltpu.CompilerParams(
            dimension_semantics=("parallel",)),
        cost_estimate=pl.CostEstimate(
            flops=flops, transcendentals=0, bytes_accessed=bytes_accessed),
    )(x_in, *kparams)

    return out_p[:B, :OUT_DIM]


def init_params(key):
    """Deterministic init matching nn.Linear shapes (stored transposed)."""
    dims = [(IN_DIM, HIDDEN[0]), (HIDDEN[0], HIDDEN[1]),
            (HIDDEN[1], HIDDEN[2]), (HIDDEN[2], OUT_DIM)]
    params = {}
    for i, (fan_in, fan_out) in enumerate(dims, start=1):
        key, kw, kb = jax.random.split(key, 3)
        bound = 1.0 / (fan_in ** 0.5)  # PyTorch default U(-1/sqrt(in), 1/sqrt(in))
        params[f"w{i}"] = jax.random.uniform(
            kw, (fan_in, fan_out), jnp.float32, -bound, bound)
        params[f"b{i}"] = jax.random.uniform(
            kb, (1, fan_out), jnp.float32, -bound, bound)
    return params


def perceptron_ref_f32(x, params):
    """Pure-JAX f32 reference (exact PyTorch semantics)."""
    h = jnp.maximum(x @ params["w1"] + params["b1"], 0.0)
    h = jnp.maximum(h @ params["w2"] + params["b2"], 0.0)
    h = jnp.maximum(h @ params["w3"] + params["b3"], 0.0)
    return h @ params["w4"] + params["b4"]


def perceptron_ref_bf16(x, params):
    """Pure-JAX reference with the same bf16-operand / f32-accum recipe."""
    w1, b1, w2, b2, w3, b3, w4, b4 = prepare_params(params)
    xb = x.astype(jnp.bfloat16)
    h = jnp.maximum(jnp.dot(xb, w1, preferred_element_type=jnp.float32) + b1, 0.0)
    h = jnp.maximum(jnp.dot(h.astype(jnp.bfloat16), w2,
                            preferred_element_type=jnp.float32) + b2, 0.0)
    h = jnp.maximum(jnp.dot(h.astype(jnp.bfloat16), w3,
                            preferred_element_type=jnp.float32) + b3, 0.0)
    out = jnp.dot(h.astype(jnp.bfloat16), w4,
                  preferred_element_type=jnp.float32) + b4
    return out[:, :OUT_DIM]


if __name__ == "__main__":
    key = jax.random.PRNGKey(0)
    key, kx = jax.random.split(key)
    batch = 8
    x = jax.random.normal(kx, (batch, IN_DIM), jnp.float32)
    params = init_params(key)

    fwd = jax.jit(perceptron_forward)
    out = jax.block_until_ready(fwd(x, params))
    assert out.shape == (batch, OUT_DIM), out.shape

    # Tight check vs a reference using the identical bf16/f32 recipe.
    ref_bf16 = perceptron_ref_bf16(x, params)
    assert jnp.allclose(out, ref_bf16, atol=1e-3, rtol=1e-3), \
        "mismatch vs bf16 reference"
    # Looser check vs the exact f32 PyTorch-semantics reference
    # (bf16 matmul operands, f32 accumulation).
    ref_f32 = perceptron_ref_f32(x, params)
    assert jnp.allclose(out, ref_f32, atol=5e-2, rtol=5e-2), \
        "mismatch vs f32 reference"

    print("KERNEL_OK")
</pallas_src>

<mosaic_0001>
module attributes {stable_mosaic.version = 11 : i64} {
  func.func @_mlp_kernel(%arg0: i32, %arg1: memref<8x784xf32, #tpu.memory_space<vmem>>, %arg2: memref<784x128xbf16, #tpu.memory_space<vmem>>, %arg3: memref<1x128xf32, #tpu.memory_space<vmem>>, %arg4: memref<128x64xbf16, #tpu.memory_space<vmem>>, %arg5: memref<1x64xf32, #tpu.memory_space<vmem>>, %arg6: memref<64x32xbf16, #tpu.memory_space<vmem>>, %arg7: memref<1x32xf32, #tpu.memory_space<vmem>>, %arg8: memref<32x128xbf16, #tpu.memory_space<vmem>>, %arg9: memref<1x128xf32, #tpu.memory_space<vmem>>, %arg10: memref<8x128xf32, #tpu.memory_space<vmem>>) attributes {dimension_semantics = [#tpu.dimension_semantics<parallel>], iteration_bounds = array<i64: 1>, scalar_prefetch = 0 : i64, scratch_operands = 0 : i64, tpu.core_type = #tpu.core_type<tc>, window_params = [{transform_indices = @transform_0, window_bounds = array<i64: 8, 784>}, {pipeline_mode = #tpu.pipeline_mode<synchronous>, transform_indices = @transform_1, window_bounds = array<i64: 784, 128>}, {pipeline_mode = #tpu.pipeline_mode<synchronous>, transform_indices = @transform_2, window_bounds = array<i64: 1, 128>}, {pipeline_mode = #tpu.pipeline_mode<synchronous>, transform_indices = @transform_3, window_bounds = array<i64: 128, 64>}, {pipeline_mode = #tpu.pipeline_mode<synchronous>, transform_indices = @transform_4, window_bounds = array<i64: 1, 64>}, {pipeline_mode = #tpu.pipeline_mode<synchronous>, transform_indices = @transform_5, window_bounds = array<i64: 64, 32>}, {pipeline_mode = #tpu.pipeline_mode<synchronous>, transform_indices = @transform_6, window_bounds = array<i64: 1, 32>}, {pipeline_mode = #tpu.pipeline_mode<synchronous>, transform_indices = @transform_7, window_bounds = array<i64: 32, 128>}, {pipeline_mode = #tpu.pipeline_mode<synchronous>, transform_indices = @transform_8, window_bounds = array<i64: 1, 128>}, {transform_indices = @transform_9, window_bounds = array<i64: 8, 128>}]} {
    %c0 = arith.constant 0 : index
    %c0_0 = arith.constant 0 : index
    %0 = vector.load %arg1[%c0, %c0_0] : memref<8x784xf32, #tpu.memory_space<vmem>>, vector<8x784xf32>
    %1 = arith.truncf %0 : vector<8x784xf32> to vector<8x784xbf16>
    %c0_1 = arith.constant 0 : index
    %c0_2 = arith.constant 0 : index
    %2 = vector.load %arg2[%c0_1, %c0_2] : memref<784x128xbf16, #tpu.memory_space<vmem>>, vector<784x128xbf16>
    %cst = arith.constant dense<0.000000e+00> : vector<8x128xf32>
    %3 = tpu.matmul %1, %2, %cst {dimension_numbers = #tpu.dot_dimension_numbers<[1], [0], [0], [1], [0, 0, 1, 1], [], []>} : vector<8x784xbf16>, vector<784x128xbf16>, vector<8x128xf32> -> vector<8x128xf32>
    %c0_3 = arith.constant 0 : index
    %c0_4 = arith.constant 0 : index
    %4 = vector.load %arg3[%c0_3, %c0_4] : memref<1x128xf32, #tpu.memory_space<vmem>>, vector<1x128xf32>
    %5 = vector.broadcast %4 : vector<1x128xf32> to vector<8x128xf32>
    %6 = arith.addf %3, %5 : vector<8x128xf32>
    %cst_5 = arith.constant 0.000000e+00 : f32
    %7 = vector.broadcast %cst_5 : f32 to vector<8x128xf32>
    %8 = arith.maximumf %6, %7 : vector<8x128xf32>
    %9 = arith.truncf %8 : vector<8x128xf32> to vector<8x128xbf16>
    %c0_6 = arith.constant 0 : index
    %c0_7 = arith.constant 0 : index
    %10 = vector.load %arg4[%c0_6, %c0_7] : memref<128x64xbf16, #tpu.memory_space<vmem>>, vector<128x64xbf16>
    %cst_8 = arith.constant dense<0.000000e+00> : vector<8x64xf32>
    %11 = tpu.matmul %9, %10, %cst_8 {dimension_numbers = #tpu.dot_dimension_numbers<[1], [0], [0], [1], [0, 0, 1, 1], [], []>} : vector<8x128xbf16>, vector<128x64xbf16>, vector<8x64xf32> -> vector<8x64xf32>
    %c0_9 = arith.constant 0 : index
    %c0_10 = arith.constant 0 : index
    %12 = vector.load %arg5[%c0_9, %c0_10] : memref<1x64xf32, #tpu.memory_space<vmem>>, vector<1x64xf32>
    %13 = vector.broadcast %12 : vector<1x64xf32> to vector<8x64xf32>
    %14 = arith.addf %11, %13 : vector<8x64xf32>
    %cst_11 = arith.constant 0.000000e+00 : f32
    %15 = vector.broadcast %cst_11 : f32 to vector<8x64xf32>
    %16 = arith.maximumf %14, %15 : vector<8x64xf32>
    %17 = arith.truncf %16 : vector<8x64xf32> to vector<8x64xbf16>
    %c0_12 = arith.constant 0 : index
    %c0_13 = arith.constant 0 : index
    %18 = vector.load %arg6[%c0_12, %c0_13] : memref<64x32xbf16, #tpu.memory_space<vmem>>, vector<64x32xbf16>
    %cst_14 = arith.constant dense<0.000000e+00> : vector<8x32xf32>
    %19 = tpu.matmul %17, %18, %cst_14 {dimension_numbers = #tpu.dot_dimension_numbers<[1], [0], [0], [1], [0, 0, 1, 1], [], []>} : vector<8x64xbf16>, vector<64x32xbf16>, vector<8x32xf32> -> vector<8x32xf32>
    %c0_15 = arith.constant 0 : index
    %c0_16 = arith.constant 0 : index
    %20 = vector.load %arg7[%c0_15, %c0_16] : memref<1x32xf32, #tpu.memory_space<vmem>>, vector<1x32xf32>
    %21 = vector.broadcast %20 : vector<1x32xf32> to vector<8x32xf32>
    %22 = arith.addf %19, %21 : vector<8x32xf32>
    %cst_17 = arith.constant 0.000000e+00 : f32
    %23 = vector.broadcast %cst_17 : f32 to vector<8x32xf32>
    %24 = arith.maximumf %22, %23 : vector<8x32xf32>
    %25 = arith.truncf %24 : vector<8x32xf32> to vector<8x32xbf16>
    %c0_18 = arith.constant 0 : index
    %c0_19 = arith.constant 0 : index
    %26 = vector.load %arg8[%c0_18, %c0_19] : memref<32x128xbf16, #tpu.memory_space<vmem>>, vector<32x128xbf16>
    %cst_20 = arith.constant dense<0.000000e+00> : vector<8x128xf32>
    %27 = tpu.matmul %25, %26, %cst_20 {dimension_numbers = #tpu.dot_dimension_numbers<[1], [0], [0], [1], [0, 0, 1, 1], [], []>} : vector<8x32xbf16>, vector<32x128xbf16>, vector<8x128xf32> -> vector<8x128xf32>
    %c0_21 = arith.constant 0 : index
    %c0_22 = arith.constant 0 : index
    %28 = vector.load %arg9[%c0_21, %c0_22] : memref<1x128xf32, #tpu.memory_space<vmem>>, vector<1x128xf32>
    %29 = vector.broadcast %28 : vector<1x128xf32> to vector<8x128xf32>
    %30 = arith.addf %27, %29 : vector<8x128xf32>
    %c0_23 = arith.constant 0 : index
    %c0_24 = arith.constant 0 : index
    %31 = vector.load %arg10[%c0_23, %c0_24] : memref<8x128xf32, #tpu.memory_space<vmem>>, vector<8x128xf32>
    tpu.vector_store %arg10[%c0_23, %c0_24], %30 {strides = array<i32>} : memref<8x128xf32, #tpu.memory_space<vmem>>, vector<8x128xf32>,
    return
  }
  func.func @transform_0(%arg0: i32) -> (i32, i32) {
    %c0_i32 = arith.constant 0 : i32
    %c0_i32_0 = arith.constant 0 : i32
    return %arg0, %c0_i32 : i32, i32
  }
  func.func @transform_1(%arg0: i32) -> (i32, i32) {
    %c0_i32 = arith.constant 0 : i32
    %c0_i32_0 = arith.constant 0 : i32
    %c0_i32_1 = arith.constant 0 : i32
    return %c0_i32, %c0_i32_0 : i32, i32
  }
  func.func @transform_2(%arg0: i32) -> (i32, i32) {
    %c0_i32 = arith.constant 0 : i32
    %c0_i32_0 = arith.constant 0 : i32
    %c0_i32_1 = arith.constant 0 : i32
    return %c0_i32, %c0_i32_0 : i32, i32
  }
  func.func @transform_3(%arg0: i32) -> (i32, i32) {
    %c0_i32 = arith.constant 0 : i32
    %c0_i32_0 = arith.constant 0 : i32
    %c0_i32_1 = arith.constant 0 : i32
    return %c0_i32, %c0_i32_0 : i32, i32
  }
  func.func @transform_4(%arg0: i32) -> (i32, i32) {
    %c0_i32 = arith.constant 0 : i32
    %c0_i32_0 = arith.constant 0 : i32
    %c0_i32_1 = arith.constant 0 : i32
    return %c0_i32, %c0_i32_0 : i32, i32
  }
  func.func @transform_5(%arg0: i32) -> (i32, i32) {
    %c0_i32 = arith.constant 0 : i32
    %c0_i32_0 = arith.constant 0 : i32
    %c0_i32_1 = arith.constant 0 : i32
    return %c0_i32, %c0_i32_0 : i32, i32
  }
  func.func @transform_6(%arg0: i32) -> (i32, i32) {
    %c0_i32 = arith.constant 0 : i32
    %c0_i32_0 = arith.constant 0 : i32
    %c0_i32_1 = arith.constant 0 : i32
    return %c0_i32, %c0_i32_0 : i32, i32
  }
  func.func @transform_7(%arg0: i32) -> (i32, i32) {
    %c0_i32 = arith.constant 0 : i32
    %c0_i32_0 = arith.constant 0 : i32
    %c0_i32_1 = arith.constant 0 : i32
    return %c0_i32, %c0_i32_0 : i32, i32
  }
  func.func @transform_8(%arg0: i32) -> (i32, i32) {
    %c0_i32 = arith.constant 0 : i32
    %c0_i32_0 = arith.constant 0 : i32
    %c0_i32_1 = arith.constant 0 : i32
    return %c0_i32, %c0_i32_0 : i32, i32
  }
  func.func @transform_9(%arg0: i32) -> (i32, i32) {
    %c0_i32 = arith.constant 0 : i32
    %c0_i32_0 = arith.constant 0 : i32
    return %arg0, %c0_i32 : i32, i32
  }
}

</mosaic_0001>

<llo_original>
// kernel: perceptron_forward.1
$region0: #{perceptron_forward.1}
  #allocation0 [shape = 'u32[]', space=smem, size = 0x4, offset = 0x4, fixed_abs, tag = 'smem constant byte address 0x4 - core index']
  #allocation1 [shape = 'u32[72,128]{1,0:T(1,128)}', space=vmem, size = 0x9000, scoped, tag = 'internal scratch']
  %s0 = inlined_call_operand.vmem [shape: f32[8,784], index: 0, kind: input, shape index: {}]
  %s1 = inlined_call_operand.vmem [shape: bf16[784,128], index: 1, kind: input, shape index: {}]
  %s2 = inlined_call_operand.vmem [shape: f32[1,128], index: 2, kind: input, shape index: {}]
  %s3 = inlined_call_operand.vmem [shape: bf16[128,64], index: 3, kind: input, shape index: {}]
  %s4 = inlined_call_operand.vmem [shape: f32[1,64], index: 4, kind: input, shape index: {}]
  %s5 = inlined_call_operand.vmem [shape: bf16[64,32], index: 5, kind: input, shape index: {}]
  %s6 = inlined_call_operand.vmem [shape: f32[1,32], index: 6, kind: input, shape index: {}]
  %s7 = inlined_call_operand.vmem [shape: bf16[32,128], index: 7, kind: input, shape index: {}]
  %s8 = inlined_call_operand.vmem [shape: f32[1,128], index: 8, kind: input, shape index: {}]
  %s9 = inlined_call_operand.hbm [shape: f32[8,128], index: 9, kind: output, shape index: {}]
  %s10 = sld [smem:[#allocation0]]
  $region46: #{perceptron_forward.1} parent=0
    _
  %s12 = ssub.s32 1, %s10
  %s13 = scalar_select 0, %s12, %s10
  $region1: #{perceptron_forward.1} parent=0
    #allocation2 [shape = 'u8[4096]{0}', space=vmem, size = 0x1000, scoped, tag = 'output window, operand 0, single buffered']
    #allocation3 [shape = 's32[1]{0}', space=sflag, size = 0x4, scoped, tag = 'scoped memory for perceptron_forward.1']
    %14 = vsyncpa [#allocation3], 0
    // Predicated region
    $region2: #{perceptron_forward.1} parent=1 // pred_check
      _
    $region3: #{perceptron_forward.1} parent=1 // pred_check_branch
      %16 = sbr.rel (0) target = $region5
    $region4: #{perceptron_forward.1} parent=1 // pred_region
      _
    $region5: #{perceptron_forward.1} parent=1 // pred_fallthru
      _
    // Predicated region
    $region6: #{perceptron_forward.1} parent=1 // pred_check
      _
    $region7: #{perceptron_forward.1} parent=1 // pred_check_branch
      %18 = sbr.rel (0) target = $region9
    $region8: #{perceptron_forward.1} parent=1 // pred_region
      _
    $region9: #{perceptron_forward.1} parent=1 // pred_fallthru
      _
    // Predicated region
    $region10: #{perceptron_forward.1} parent=1 // pred_check
      _
    $region11: #{perceptron_forward.1} parent=1 // pred_check_branch
      %20 = sbr.rel (0) target = $region13
    $region12: #{perceptron_forward.1} parent=1 // pred_region
      _
    $region13: #{perceptron_forward.1} parent=1 // pred_fallthru
      _
    // Predicated region
    $region14: #{perceptron_forward.1} parent=1 // pred_check
      _
    $region15: #{perceptron_forward.1} parent=1 // pred_check_branch
      %22 = sbr.rel (0) target = $region17
    $region16: #{perceptron_forward.1} parent=1 // pred_region
      _
    $region17: #{perceptron_forward.1} parent=1 // pred_fallthru
      _
    // Predicated region
    $region18: #{perceptron_forward.1} parent=1 // pred_check
      _
    $region19: #{perceptron_forward.1} parent=1 // pred_check_branch
      %24 = sbr.rel (0) target = $region21
    $region20: #{perceptron_forward.1} parent=1 // pred_region
      _
    $region21: #{perceptron_forward.1} parent=1 // pred_fallthru
      _
    // Predicated region
    $region22: #{perceptron_forward.1} parent=1 // pred_check
      _
    $region23: #{perceptron_forward.1} parent=1 // pred_check_branch
      %26 = sbr.rel (0) target = $region25
    $region24: #{perceptron_forward.1} parent=1 // pred_region
      _
    $region25: #{perceptron_forward.1} parent=1 // pred_fallthru
      _
    // Predicated region
    $region26: #{perceptron_forward.1} parent=1 // pred_check
      _
    $region27: #{perceptron_forward.1} parent=1 // pred_check_branch
      %28 = sbr.rel (0) target = $region29
    $region28: #{perceptron_forward.1} parent=1 // pred_region
      _
    $region29: #{perceptron_forward.1} parent=1 // pred_fallthru
      _
    // Predicated region
    $region30: #{perceptron_forward.1} parent=1 // pred_check
      _
    $region31: #{perceptron_forward.1} parent=1 // pred_check_branch
      %30 = sbr.rel (0) target = $region33
    $region32: #{perceptron_forward.1} parent=1 // pred_region
      _
    $region33: #{perceptron_forward.1} parent=1 // pred_fallthru
      _
    // Predicated region
    $region34: #{perceptron_forward.1} parent=1 // pred_check
      _
    $region35: #{perceptron_forward.1} parent=1 // pred_check_branch
      %32 = sbr.rel (0) target = $region37
    $region36: #{perceptron_forward.1} parent=1 // pred_region
      _
    $region37: #{perceptron_forward.1} parent=1 // pred_fallthru
      _
    %v34 = vld [vmem:[%s0] sm:$0xff]
    %v35 = vld [vmem:[%s0 + $0x8] sm:$0xff]
    %v36 = vld [vmem:[%s0 + $0x10] sm:$0xff]
    %v37 = vld [vmem:[%s0 + $0x18] sm:$0xff]
    %v38 = vld [vmem:[%s0 + $0x20] sm:$0xff]
    %v39 = vld [vmem:[%s0 + $0x28] sm:$0xff]
    %v40 = vld [vmem:[%s0 + $0x30] sm:$0xff]
    %v41 = vpack.c.bf16 %v34, %v34
    %v42 = vpack.c.bf16 %v35, %v35
    %v43 = vpack.c.bf16 %v36, %v36
    %v44 = vpack.c.bf16 %v37, %v37
    %v45 = vpack.c.bf16 %v38, %v38
    %v46 = vpack.c.bf16 %v39, %v39
    %v47 = vpack.c.bf16 %v40, %v40
    %v48 = vld [vmem:[%s1] sm:$0xf]
    %v49 = vld [vmem:[%s1 + $0x4] sm:$0xf]
    %v50 = vld [vmem:[%s1 + $0x8] sm:$0xf]
    %v51 = vld [vmem:[%s1 + $0xc] sm:$0xf]
    %v52 = vld [vmem:[%s1 + $0x10] sm:$0xf]
    %v53 = vld [vmem:[%s1 + $0x14] sm:$0xf]
    %v54 = vld [vmem:[%s1 + $0x18] sm:$0xf]
    %v55 = vld [vmem:[%s1 + $0x1c] sm:$0xf]
    %v56 = vld [vmem:[%s1 + $0x20] sm:$0xf]
    %v57 = vld [vmem:[%s1 + $0x24] sm:$0xf]
    %v58 = vld [vmem:[%s1 + $0x28] sm:$0xf]
    %v59 = vld [vmem:[%s1 + $0x2c] sm:$0xf]
    %v60 = vld [vmem:[%s1 + $0x30] sm:$0xf]
    %v61 = vld [vmem:[%s1 + $0x34] sm:$0xf]
    %v62 = vld [vmem:[%s1 + $0x38] sm:$0xf]
    %v63 = vld [vmem:[%s1 + $0x3c] sm:$0xf]
    %v64 = vld [vmem:[%s1 + $0x40] sm:$0xf]
    %v65 = vld [vmem:[%s1 + $0x44] sm:$0xf]
    %v66 = vld [vmem:[%s1 + $0x48] sm:$0xf]
    %v67 = vld [vmem:[%s1 + $0x4c] sm:$0xf]
    %v68 = vld [vmem:[%s1 + $0x50] sm:$0xf]
    %v69 = vld [vmem:[%s1 + $0x54] sm:$0xf]
    %v70 = vld [vmem:[%s1 + $0x58] sm:$0xf]
    %v71 = vld [vmem:[%s1 + $0x5c] sm:$0xf]
    %v72 = vld [vmem:[%s1 + $0x60] sm:$0xf]
    %v73 = vld [vmem:[%s1 + $0x64] sm:$0xf]
    %v74 = vld [vmem:[%s1 + $0x68] sm:$0xf]
    %v75 = vld [vmem:[%s1 + $0x6c] sm:$0xf]
    %v76 = vld [vmem:[%s1 + $0x70] sm:$0xf]
    %v77 = vld [vmem:[%s1 + $0x74] sm:$0xf]
    %v78 = vld [vmem:[%s1 + $0x78] sm:$0xf]
    %v79 = vld [vmem:[%s1 + $0x7c] sm:$0xf]
    %v80 = vld [vmem:[%s1 + $0x80] sm:$0xf]
    %v81 = vld [vmem:[%s1 + $0x84] sm:$0xf]
    %v82 = vld [vmem:[%s1 + $0x88] sm:$0xf]
    %v83 = vld [vmem:[%s1 + $0x8c] sm:$0xf]
    %v84 = vld [vmem:[%s1 + $0x90] sm:$0xf]
    %v85 = vld [vmem:[%s1 + $0x94] sm:$0xf]
    %v86 = vld [vmem:[%s1 + $0x98] sm:$0xf]
    %v87 = vld [vmem:[%s1 + $0x9c] sm:$0xf]
    %v88 = vld [vmem:[%s1 + $0xa0] sm:$0xf]
    %v89 = vld [vmem:[%s1 + $0xa4] sm:$0xf]
    %v90 = vld [vmem:[%s1 + $0xa8] sm:$0xf]
    %v91 = vld [vmem:[%s1 + $0xac] sm:$0xf]
    %v92 = vld [vmem:[%s1 + $0xb0] sm:$0xf]
    %v93 = vld [vmem:[%s1 + $0xb4] sm:$0xf]
    %v94 = vld [vmem:[%s1 + $0xb8] sm:$0xf]
    %v95 = vld [vmem:[%s1 + $0xbc] sm:$0xf]
    %v96 = vld [vmem:[%s1 + $0xc0] sm:$0xf]
    %v97 = vld [vmem:[%s1 + $0xc4] sm:$0xf]
    %v98 = vld [vmem:[%s1 + $0xc8] sm:$0xf]
    %v99 = vld [vmem:[%s1 + $0xcc] sm:$0xf]
    %v100 = vld [vmem:[%s1 + $0xd0] sm:$0xf]
    %v101 = vld [vmem:[%s1 + $0xd4] sm:$0xf]
    %v102 = vld [vmem:[%s1 + $0xd8] sm:$0xf]
    %v103 = vld [vmem:[%s1 + $0xdc] sm:$0xf]
    %v104 = vld [vmem:[%s1 + $0xe0] sm:$0xf]
    %v105 = vld [vmem:[%s1 + $0xe4] sm:$0xf]
    %v106 = vld [vmem:[%s1 + $0xe8] sm:$0xf]
    %v107 = vld [vmem:[%s1 + $0xec] sm:$0xf]
    %v108 = vld [vmem:[%s1 + $0xf0] sm:$0xf]
    %v109 = vld [vmem:[%s1 + $0xf4] sm:$0xf]
    %v110 = vld [vmem:[%s1 + $0xf8] sm:$0xf]
    %v111 = vld [vmem:[%s1 + $0xfc] sm:$0xf]
    %v112 = vld [vmem:[%s1 + $0x100] sm:$0xf]
    %v113 = vld [vmem:[%s1 + $0x104] sm:$0xf]
    %v114 = vld [vmem:[%s1 + $0x108] sm:$0xf]
    %v115 = vld [vmem:[%s1 + $0x10c] sm:$0xf]
    %v116 = vld [vmem:[%s1 + $0x110] sm:$0xf]
    %v117 = vld [vmem:[%s1 + $0x114] sm:$0xf]
    %v118 = vld [vmem:[%s1 + $0x118] sm:$0xf]
    %v119 = vld [vmem:[%s1 + $0x11c] sm:$0xf]
    %v120 = vld [vmem:[%s1 + $0x120] sm:$0xf]
    %v121 = vld [vmem:[%s1 + $0x124] sm:$0xf]
    %v122 = vld [vmem:[%s1 + $0x128] sm:$0xf]
    %v123 = vld [vmem:[%s1 + $0x12c] sm:$0xf]
    %v124 = vld [vmem:[%s1 + $0x130] sm:$0xf]
    %v125 = vld [vmem:[%s1 + $0x134] sm:$0xf]
    %v126 = vld [vmem:[%s1 + $0x138] sm:$0xf]
    %v127 = vld [vmem:[%s1 + $0x13c] sm:$0xf]
    %v128 = vld [vmem:[%s1 + $0x140] sm:$0xf]
    %v129 = vld [vmem:[%s1 + $0x144] sm:$0xf]
    %v130 = vld [vmem:[%s1 + $0x148] sm:$0xf]
    %v131 = vld [vmem:[%s1 + $0x14c] sm:$0xf]
    %v132 = vld [vmem:[%s1 + $0x150] sm:$0xf]
    %v133 = vld [vmem:[%s1 + $0x154] sm:$0xf]
    %v134 = vld [vmem:[%s1 + $0x158] sm:$0xf]
    %v135 = vld [vmem:[%s1 + $0x15c] sm:$0xf]
    %v136 = vld [vmem:[%s1 + $0x160] sm:$0xf]
    %v137 = vld [vmem:[%s1 + $0x164] sm:$0xf]
    %v138 = vld [vmem:[%s1 + $0x168] sm:$0xf]
    %v139 = vld [vmem:[%s1 + $0x16c] sm:$0xf]
    %v140 = vld [vmem:[%s1 + $0x170] sm:$0xf]
    %v141 = vld [vmem:[%s1 + $0x174] sm:$0xf]
    %v142 = vld [vmem:[%s1 + $0x178] sm:$0xf]
    %v143 = vld [vmem:[%s1 + $0x17c] sm:$0xf]
    %v144 = vld [vmem:[%s1 + $0x180] sm:$0xf]
    %v145 = vld [vmem:[%s1 + $0x184] sm:$0xf]
    %v146 = vld [vmem:[%s2] sm:$0x1]
    %v148 = vperm.slane %v146, 0
    %v248 = vunpack.c.l.b16 %v48
    %v249 = vunpack.c.l.b16 %v49
    %v250 = vunpack.c.l.b16 %v50
    %v251 = vunpack.c.l.b16 %v51
    %v252 = vunpack.c.l.b16 %v52
    %v253 = vunpack.c.l.b16 %v53
    %v254 = vunpack.c.l.b16 %v54
    %v255 = vunpack.c.l.b16 %v55
    %v256 = vunpack.c.l.b16 %v56
    %v257 = vunpack.c.l.b16 %v57
    %v258 = vunpack.c.l.b16 %v58
    %v259 = vunpack.c.l.b16 %v59
    %v260 = vunpack.c.l.b16 %v60
    %v261 = vunpack.c.l.b16 %v61
    %v262 = vunpack.c.l.b16 %v62
    %v263 = vunpack.c.l.b16 %v63
    %v264 = vunpack.c.l.b16 %v64
    %v265 = vunpack.c.l.b16 %v65
    %v266 = vunpack.c.l.b16 %v66
    %v267 = vunpack.c.l.b16 %v67
    %v268 = vunpack.c.l.b16 %v68
    %v269 = vunpack.c.l.b16 %v69
    %v270 = vunpack.c.l.b16 %v70
    %v271 = vunpack.c.l.b16 %v71
    %v272 = vunpack.c.l.b16 %v72
    %v273 = vunpack.c.l.b16 %v73
    %v274 = vunpack.c.l.b16 %v74
    %v275 = vunpack.c.l.b16 %v75
    %v276 = vunpack.c.l.b16 %v76
    %v277 = vunpack.c.l.b16 %v77
    %v278 = vunpack.c.l.b16 %v78
    %v279 = vunpack.c.l.b16 %v79
    %v280 = vunpack.c.l.b16 %v80
    %v281 = vunpack.c.l.b16 %v81
    %v282 = vunpack.c.l.b16 %v82
    %v283 = vunpack.c.l.b16 %v83
    %v284 = vunpack.c.l.b16 %v84
    %v285 = vunpack.c.l.b16 %v85
    %v286 = vunpack.c.l.b16 %v86
    %v287 = vunpack.c.l.b16 %v87
    %v288 = vunpack.c.l.b16 %v88
    %v289 = vunpack.c.l.b16 %v89
    %v290 = vunpack.c.l.b16 %v90
    %v291 = vunpack.c.l.b16 %v91
    %v292 = vunpack.c.l.b16 %v92
    %v293 = vunpack.c.l.b16 %v93
    %v294 = vunpack.c.l.b16 %v94
    %v295 = vunpack.c.l.b16 %v95
    %v296 = vunpack.c.l.b16 %v96
    %v297 = vunpack.c.l.b16 %v97
    %v298 = vunpack.c.l.b16 %v98
    %v299 = vunpack.c.l.b16 %v99
    %v300 = vunpack.c.l.b16 %v100
    %v301 = vunpack.c.l.b16 %v101
    %v302 = vunpack.c.l.b16 %v102
    %v303 = vunpack.c.l.b16 %v103
    %v304 = vunpack.c.l.b16 %v104
    %v305 = vunpack.c.l.b16 %v105
    %v306 = vunpack.c.l.b16 %v106
    %v307 = vunpack.c.l.b16 %v107
    %v308 = vunpack.c.l.b16 %v108
    %v309 = vunpack.c.l.b16 %v109
    %v310 = vunpack.c.l.b16 %v110
    %v311 = vunpack.c.l.b16 %v111
    %v312 = vunpack.c.l.b16 %v112
    %v313 = vunpack.c.l.b16 %v113
    %v314 = vunpack.c.l.b16 %v114
    %v315 = vunpack.c.l.b16 %v115
    %v316 = vunpack.c.l.b16 %v116
    %v317 = vunpack.c.l.b16 %v117
    %v318 = vunpack.c.l.b16 %v118
    %v319 = vunpack.c.l.b16 %v119
    %v320 = vunpack.c.l.b16 %v120
    %v321 = vunpack.c.l.b16 %v121
    %v322 = vunpack.c.l.b16 %v122
    %v323 = vunpack.c.l.b16 %v123
    %v324 = vunpack.c.l.b16 %v124
    %v325 = vunpack.c.l.b16 %v125
    %v326 = vunpack.c.l.b16 %v126
    %v327 = vunpack.c.l.b16 %v127
    %v328 = vunpack.c.l.b16 %v128
    %v329 = vunpack.c.l.b16 %v129
    %v330 = vunpack.c.l.b16 %v130
    %v331 = vunpack.c.l.b16 %v131
    %v332 = vunpack.c.l.b16 %v132
    %v333 = vunpack.c.l.b16 %v133
    %v334 = vunpack.c.l.b16 %v134
    %v335 = vunpack.c.l.b16 %v135
    %v336 = vunpack.c.l.b16 %v136
    %v337 = vunpack.c.l.b16 %v137
    %v338 = vunpack.c.l.b16 %v138
    %v339 = vunpack.c.l.b16 %v139
    %v340 = vunpack.c.l.b16 %v140
    %v341 = vunpack.c.l.b16 %v141
    %v342 = vunpack.c.l.b16 %v142
    %v343 = vunpack.c.l.b16 %v143
    %v344 = vunpack.c.l.b16 %v144
    %v345 = vunpack.c.l.b16 %v145
    %v346 = vpack.c.b16 %v249, %v248
    %v347 = vpack.c.b16 %v251, %v250
    %v348 = vpack.c.b16 %v253, %v252
    %v349 = vpack.c.b16 %v255, %v254
    %v350 = vpack.c.b16 %v257, %v256
    %v351 = vpack.c.b16 %v259, %v258
    %v352 = vpack.c.b16 %v261, %v260
    %v353 = vpack.c.b16 %v263, %v262
    %v354 = vpack.c.b16 %v265, %v264
    %v355 = vpack.c.b16 %v267, %v266
    %v356 = vpack.c.b16 %v269, %v268
    %v357 = vpack.c.b16 %v271, %v270
    %v358 = vpack.c.b16 %v273, %v272
    %v359 = vpack.c.b16 %v275, %v274
    %v360 = vpack.c.b16 %v277, %v276
    %v361 = vpack.c.b16 %v279, %v278
    %v362 = vpack.c.b16 %v281, %v280
    %v363 = vpack.c.b16 %v283, %v282
    %v364 = vpack.c.b16 %v285, %v284
    %v365 = vpack.c.b16 %v287, %v286
    %v366 = vpack.c.b16 %v289, %v288
    %v367 = vpack.c.b16 %v291, %v290
    %v368 = vpack.c.b16 %v293, %v292
    %v369 = vpack.c.b16 %v295, %v294
    %v370 = vpack.c.b16 %v297, %v296
    %v371 = vpack.c.b16 %v299, %v298
    %v372 = vpack.c.b16 %v301, %v300
    %v373 = vpack.c.b16 %v303, %v302
    %v374 = vpack.c.b16 %v305, %v304
    %v375 = vpack.c.b16 %v307, %v306
    %v376 = vpack.c.b16 %v309, %v308
    %v377 = vpack.c.b16 %v311, %v310
    %v378 = vpack.c.b16 %v313, %v312
    %v379 = vpack.c.b16 %v315, %v314
    %v380 = vpack.c.b16 %v317, %v316
    %v381 = vpack.c.b16 %v319, %v318
    %v382 = vpack.c.b16 %v321, %v320
    %v383 = vpack.c.b16 %v323, %v322
    %v384 = vpack.c.b16 %v325, %v324
    %v385 = vpack.c.b16 %v327, %v326
    %v386 = vpack.c.b16 %v329, %v328
    %v387 = vpack.c.b16 %v331, %v330
    %v388 = vpack.c.b16 %v333, %v332
    %v389 = vpack.c.b16 %v335, %v334
    %v390 = vpack.c.b16 %v337, %v336
    %v391 = vpack.c.b16 %v339, %v338
    %v392 = vpack.c.b16 %v341, %v340
    %v393 = vpack.c.b16 %v343, %v342
    %v394 = vpack.c.b16 %v345, %v344
    %vm444 = vcmask 130048
    %v446 = vsel %vm444, %v47, 0
    %448 = vmatpush.bf16.msra.mxu0 %v353
    %449 = vmatpush.bf16.msra.mxu0 %v352
    %450 = vmatpush.bf16.msra.mxu0 %v351
    %451 = vmatpush.bf16.msra.mxu0 %v350
    %452 = vmatpush.bf16.msra.mxu0 %v349
    %453 = vmatpush.bf16.msra.mxu0 %v348
    %454 = vmatpush.bf16.msra.mxu0 %v347
    %455 = vmatpush.bf16.msra.mxu0 %v346
    %456 = vmatmul.bf16.gmra.mxu0 %v41
    %v457 = vpop.f32.mrf.mxu0
    %v458 = vadd.f32 %v148, %v457
    %v459 = vpop.f32.mrf.mxu0
    %460 = vdwg.mxu0
    %461 = vmatpush.bf16.msra.mxu0 %v361
    %462 = vmatpush.bf16.msra.mxu0 %v360
    %463 = vmatpush.bf16.msra.mxu0 %v359
    %464 = vmatpush.bf16.msra.mxu0 %v358
    %465 = vmatpush.bf16.msra.mxu0 %v357
    %466 = vmatpush.bf16.msra.mxu0 %v356
    %467 = vmatpush.bf16.msra.mxu0 %v355
    %468 = vmatpush.bf16.msra.mxu0 %v354
    %469 = vmatmul.bf16.gmra.mxu0 %v42
    %v470 = vpop.f32.mrf.mxu0
    %v471 = vadd.f32 %v458, %v470
    %v472 = vpop.f32.mrf.mxu0
    %473 = vdwg.mxu0
    %474 = vmatpush.bf16.msra.mxu0 %v369
    %475 = vmatpush.bf16.msra.mxu0 %v368
    %476 = vmatpush.bf16.msra.mxu0 %v367
    %477 = vmatpush.bf16.msra.mxu0 %v366
    %478 = vmatpush.bf16.msra.mxu0 %v365
    %479 = vmatpush.bf16.msra.mxu0 %v364
    %480 = vmatpush.bf16.msra.mxu0 %v363
    %481 = vmatpush.bf16.msra.mxu0 %v362
    %482 = vmatmul.bf16.gmra.mxu0 %v43
    %v483 = vpop.f32.mrf.mxu0
    %v484 = vadd.f32 %v471, %v483
    %v485 = vpop.f32.mrf.mxu0
    %486 = vdwg.mxu0
    %487 = vmatpush.bf16.msra.mxu0 %v377
    %488 = vmatpush.bf16.msra.mxu0 %v376
    %489 = vmatpush.bf16.msra.mxu0 %v375
    %490 = vmatpush.bf16.msra.mxu0 %v374
    %491 = vmatpush.bf16.msra.mxu0 %v373
    %492 = vmatpush.bf16.msra.mxu0 %v372
    %493 = vmatpush.bf16.msra.mxu0 %v371
    %494 = vmatpush.bf16.msra.mxu0 %v370
    %495 = vmatmul.bf16.gmra.mxu0 %v44
    %v496 = vpop.f32.mrf.mxu0
    %v497 = vadd.f32 %v484, %v496
    %v498 = vpop.f32.mrf.mxu0
    %499 = vdwg.mxu0
    %500 = vmatpush.bf16.msra.mxu0 %v385
    %501 = vmatpush.bf16.msra.mxu0 %v384
    %502 = vmatpush.bf16.msra.mxu0 %v383
    %503 = vmatpush.bf16.msra.mxu0 %v382
    %504 = vmatpush.bf16.msra.mxu0 %v381
    %505 = vmatpush.bf16.msra.mxu0 %v380
    %506 = vmatpush.bf16.msra.mxu0 %v379
    %507 = vmatpush.bf16.msra.mxu0 %v378
    %508 = vmatmul.bf16.gmra.mxu0 %v45
    %v509 = vpop.f32.mrf.mxu0
    %v510 = vadd.f32 %v497, %v509
    %v511 = vpop.f32.mrf.mxu0
    %512 = vdwg.mxu0
    %513 = vmatpush.bf16.msra.mxu0 %v393
    %514 = vmatpush.bf16.msra.mxu0 %v392
    %515 = vmatpush.bf16.msra.mxu0 %v391
    %516 = vmatpush.bf16.msra.mxu0 %v390
    %517 = vmatpush.bf16.msra.mxu0 %v389
    %518 = vmatpush.bf16.msra.mxu0 %v388
    %519 = vmatpush.bf16.msra.mxu0 %v387
    %520 = vmatpush.bf16.msra.mxu0 %v386
    %521 = vmatmul.bf16.gmra.mxu0 %v46
    %v522 = vpop.f32.mrf.mxu0
    %v523 = vadd.f32 %v510, %v522
    %v524 = vpop.f32.mrf.mxu0
    %525 = vdwg.mxu0
    %526 = vmatpush.bf16.msra.mxu0 0
    %527 = vmatpush.bf16.msra.mxu0 0
    %528 = vmatpush.bf16.msra.mxu0 0
    %529 = vmatpush.bf16.msra.mxu0 0
    %530 = vmatpush.bf16.msra.mxu0 0
    %531 = vmatpush.bf16.msra.mxu0 0
    %532 = vmatpush.bf16.msra.mxu0 0
    %533 = vmatpush.bf16.msra.mxu0 %v394
    %534 = vmatmul.bf16.gmra.mxu0 %v446
    %v535 = vpop.f32.mrf.mxu0
    %v536 = vadd.f32 %v523, %v535
    %v537 = vpop.f32.mrf.mxu0
    %538 = vdwg.mxu0
    %v539 = vmax.f32 %v536, 0.0
    %v540 = vpack.c.bf16 %v539, %v539
    %v541 = vld [vmem:[%s3] sm:$0xf]
    %v542 = vld [vmem:[%s3 + $0x4] sm:$0xf]
    %v543 = vld [vmem:[%s3 + $0x8] sm:$0xf]
    %v544 = vld [vmem:[%s3 + $0xc] sm:$0xf]
    %v545 = vld [vmem:[%s3 + $0x10] sm:$0xf]
    %v546 = vld [vmem:[%s3 + $0x14] sm:$0xf]
    %v547 = vld [vmem:[%s3 + $0x18] sm:$0xf]
    %v548 = vld [vmem:[%s3 + $0x1c] sm:$0xf]
    %v549 = vld [vmem:[%s3 + $0x20] sm:$0xf]
    %v550 = vld [vmem:[%s3 + $0x24] sm:$0xf]
    %v551 = vld [vmem:[%s3 + $0x28] sm:$0xf]
    %v552 = vld [vmem:[%s3 + $0x2c] sm:$0xf]
    %v553 = vld [vmem:[%s3 + $0x30] sm:$0xf]
    %v554 = vld [vmem:[%s3 + $0x34] sm:$0xf]
    %v555 = vld [vmem:[%s3 + $0x38] sm:$0xf]
    %v556 = vld [vmem:[%s3 + $0x3c] sm:$0xf]
    %v557 = vld [vmem:[%s4] sm:$0x1]
    %v559 = vperm.slane %v557, 0
    %v577 = vunpack.c.l.b16 %v541
    %v578 = vunpack.c.l.b16 %v542
    %v579 = vunpack.c.l.b16 %v543
    %v580 = vunpack.c.l.b16 %v544
    %v581 = vunpack.c.l.b16 %v545
    %v582 = vunpack.c.l.b16 %v546
    %v583 = vunpack.c.l.b16 %v547
    %v584 = vunpack.c.l.b16 %v548
    %v585 = vunpack.c.l.b16 %v549
    %v586 = vunpack.c.l.b16 %v550
    %v587 = vunpack.c.l.b16 %v551
    %v588 = vunpack.c.l.b16 %v552
    %v589 = vunpack.c.l.b16 %v553
    %v590 = vunpack.c.l.b16 %v554
    %v591 = vunpack.c.l.b16 %v555
    %v592 = vunpack.c.l.b16 %v556
    %v593 = vpack.c.b16 %v578, %v577
    %v594 = vpack.c.b16 %v580, %v579
    %v595 = vpack.c.b16 %v582, %v581
    %v596 = vpack.c.b16 %v584, %v583
    %v597 = vpack.c.b16 %v586, %v585
    %v598 = vpack.c.b16 %v588, %v587
    %v599 = vpack.c.b16 %v590, %v589
    %v600 = vpack.c.b16 %v592, %v591
    %609 = vmatpush.bf16.msra.mxu0 %v600
    %610 = vmatpush.bf16.msra.mxu0 %v599
    %611 = vmatpush.bf16.msra.mxu0 %v598
    %612 = vmatpush.bf16.msra.mxu0 %v597
    %613 = vmatpush.bf16.msra.mxu0 %v596
    %614 = vmatpush.bf16.msra.mxu0 %v595
    %615 = vmatpush.bf16.msra.mxu0 %v594
    %616 = vmatpush.bf16.msra.mxu0 %v593
    %617 = vmatmul.bf16.gmra.mxu0 %v540
    %v618 = vpop.f32.mrf.mxu0
    %v619 = vadd.f32 %v559, %v618
    %v620 = vpop.f32.mrf.mxu0
    %621 = vdwg.mxu0
    %v622 = vmax.f32 %v619, 0.0
    %v623 = vpack.c.bf16 %v622, %v622
    %v624 = vld [vmem:[%s5] sm:$0xf]
    %v625 = vld [vmem:[%s5 + $0x4] sm:$0xf]
    %v626 = vld [vmem:[%s5 + $0x8] sm:$0xf]
    %v627 = vld [vmem:[%s5 + $0xc] sm:$0xf]
    %v628 = vld [vmem:[%s5 + $0x10] sm:$0xf]
    %v629 = vld [vmem:[%s5 + $0x14] sm:$0xf]
    %v630 = vld [vmem:[%s5 + $0x18] sm:$0xf]
    %v631 = vld [vmem:[%s5 + $0x1c] sm:$0xf]
    %v632 = vld [vmem:[%s6] sm:$0x1]
    %v634 = vperm.slane %v632, 0
    %v644 = vunpack.c.l.b16 %v624
    %v645 = vunpack.c.l.b16 %v625
    %v646 = vunpack.c.l.b16 %v626
    %v647 = vunpack.c.l.b16 %v627
    %v648 = vunpack.c.l.b16 %v628
    %v649 = vunpack.c.l.b16 %v629
    %v650 = vunpack.c.l.b16 %v630
    %v651 = vunpack.c.l.b16 %v631
    %v652 = vpack.c.b16 %v645, %v644
    %v653 = vpack.c.b16 %v647, %v646
    %v654 = vpack.c.b16 %v649, %v648
    %v655 = vpack.c.b16 %v651, %v650
    %vm660 = vcmask 523264
    %v662 = vsel %vm660, %v623, 0
    %664 = vmatpush.bf16.msra.mxu0 0
    %665 = vmatpush.bf16.msra.mxu0 0
    %666 = vmatpush.bf16.msra.mxu0 0
    %667 = vmatpush.bf16.msra.mxu0 0
    %668 = vmatpush.bf16.msra.mxu0 %v655
    %669 = vmatpush.bf16.msra.mxu0 %v654
    %670 = vmatpush.bf16.msra.mxu0 %v653
    %671 = vmatpush.bf16.msra.mxu0 %v652
    %672 = vmatmul.bf16.gmra.mxu0 %v662
    %v673 = vpop.f32.mrf.mxu0
    %v674 = vadd.f32 %v634, %v673
    %v675 = vpop.f32.mrf.mxu0
    %676 = vdwg.mxu0
    %v677 = vmax.f32 %v674, 0.0
    %v678 = vpack.c.bf16 %v677, %v677
    %v679 = vld [vmem:[%s7] sm:$0xf]
    %v680 = vld [vmem:[%s7 + $0x4] sm:$0xf]
    %v681 = vld [vmem:[%s7 + $0x8] sm:$0xf]
    %v682 = vld [vmem:[%s7 + $0xc] sm:$0xf]
    %v683 = vld [vmem:[%s8] sm:$0x1]
    %v685 = vperm.slane %v683, 0
    %v691 = vunpack.c.l.b16 %v679
    %v692 = vunpack.c.l.b16 %v680
    %v693 = vunpack.c.l.b16 %v681
    %v694 = vunpack.c.l.b16 %v682
    %v695 = vpack.c.b16 %v692, %v691
    %v696 = vpack.c.b16 %v694, %v693
    %vm699 = vcmask 261120
    %v701 = vsel %vm699, %v678, 0
    %703 = vmatpush.bf16.msra.mxu0 0
    %704 = vmatpush.bf16.msra.mxu0 0
    %705 = vmatpush.bf16.msra.mxu0 0
    %706 = vmatpush.bf16.msra.mxu0 0
    %707 = vmatpush.bf16.msra.mxu0 0
    %708 = vmatpush.bf16.msra.mxu0 0
    %709 = vmatpush.bf16.msra.mxu0 %v696
    %710 = vmatpush.bf16.msra.mxu0 %v695
    %711 = vmatmul.bf16.gmra.mxu0 %v701
    %v712 = vpop.f32.mrf.mxu0
    %v713 = vadd.f32 %v685, %v712
    %v714 = vpop.f32.mrf.mxu0
    %715 = vdwg.mxu0
    %716 = vst [vmem:[#allocation2] sm:$0xff] %v713
    // Predicated region
    $region38: #{perceptron_forward.1} parent=1 // pred_check
      _
    $region39: #{perceptron_forward.1} parent=1 // pred_check_branch
      %718 = sbr.rel (0) target = $region41
    $region40: #{perceptron_forward.1} parent=1 // pred_region
      %720 = vsyncadd [#allocation3], 0
      %s722 = sshll.u32 [#allocation2], 4
      %s723 = int_to_ptr.vmem [resolvable:$true] %s722
      %s724 = sshll.u32 %s9, 4
      %s725 = int_to_ptr.hbm [resolvable:$true] %s724
      %727 = dma.vmem_to_hbm [thread:$0]  %s723, 128, %s725, [#allocation3]
    $region41: #{perceptron_forward.1} parent=1 // pred_fallthru
      _
    // Predicated region
    $region42: #{perceptron_forward.1} parent=1 // pred_check
      _
    $region43: #{perceptron_forward.1} parent=1 // pred_check_branch
      %729 = sbr.rel (0) target = $region45
    $region44: #{perceptron_forward.1} parent=1 // pred_region
      %731 = dma.done [#allocation3], 128
    $region45: #{perceptron_forward.1} parent=1 // pred_fallthru
      _
    %732 = vsyncpa [#allocation3], 1

</llo_original>
